<compile_context>
chip_gen: v6e
topology: v6e:2x2x1
jax: 0.10.0
libtpu: 0.0.40
codegen_flags: <defaults>
</compile_context>

<pallas_src>
import jax
import jax.numpy as jnp
from jax.experimental import pallas as pl
from jax.experimental.pallas import tpu as pltpu


def _round_up(x, m):
    return (x + m - 1) // m * m


def qnet_kernel(obs_ref, act_ref, wo_ref, wa_ref, bo_ref, ba_ref,
                ws_ref, bs_ref, out_ref):
    """One batch tile: obs/act (TB, E) -> out (1, 1, TB) lane-dense q values."""
    # Two small hidden projections on the MXU, f32 accumulation, f32 bias add.
    obs_h = jnp.dot(obs_ref[...], wo_ref[...],
                    preferred_element_type=jnp.float32) + bo_ref[...]
    act_h = jnp.dot(act_ref[...], wa_ref[...],
                    preferred_element_type=jnp.float32) + ba_ref[...]
    # Elementwise product + LeakyReLU(0.2) in f32 on the VPU.
    z = obs_h * act_h
    z = jnp.where(z >= 0, z, 0.2 * z)
    # Linear(H, 1) as a VPU multiply + lane reduction; b_score is an SMEM scalar.
    q = jnp.sum(z * ws_ref[...], axis=-1) + bs_ref[0]            # (TB,)
    out_ref[...] = q[None, None, :].astype(out_ref.dtype)        # lane-dense store


def fuse_params(params, *, weight_dtype=jnp.bfloat16):
    """One-time packaging of the kernel operands.

    w_obs / w_act are stored pre-transposed as [in, out] and cast once to the
    streaming dtype (bf16 by default); biases and the score row stay f32."""
    return {
        "w_obs": params["w_obs"].astype(weight_dtype),     # (E, H)
        "w_act": params["w_act"].astype(weight_dtype),     # (E, H)
        "b_obs": params["b_obs"].astype(jnp.float32),      # (1, H)
        "b_act": params["b_act"].astype(jnp.float32),      # (1, H)
        "w_score": params["w_score"].astype(jnp.float32),  # (1, H) PyTorch row
        "b_score": params["b_score"].astype(jnp.float32),  # (1,) -> SMEM scalar
    }


def qnet_forward(observation, actions, fused, *, block_rows=2048):
    """observation, actions: (B, E).  Returns q_values (B, 1) float32."""
    B, E = observation.shape
    H = fused["w_obs"].shape[1]
    act_dtype = fused["w_obs"].dtype
    itemsize = jnp.dtype(act_dtype).itemsize

    # Stream activations in the weights' storage dtype (bf16 by default).
    # No-op if the caller already supplies that dtype.
    if observation.dtype != act_dtype:
        observation = observation.astype(act_dtype)
    if actions.dtype != act_dtype:
        actions = actions.astype(act_dtype)

    # Batch tile: large (amortizes ~0.35us per-step overhead) but capped near
    # B/2 so there are always >= 2 grid steps for v7x's two TensorCores.
    # Rows are aligned to the sublane packing of the streaming dtype.
    row_align = max(8, 32 // itemsize)
    tb = _round_up(min(block_rows, max(pl.cdiv(B, 2), row_align)), row_align)
    grid = pl.cdiv(B, tb)

    # Raise the scoped-VMEM limit only if the budget outgrows the conservative
    # default (16 MiB on v5e); never triggers at these toy sizes.
    vmem_bytes = (2 * 2 * tb * E * itemsize      # obs/act tiles, double-buffered
                  + 2 * E * H * itemsize         # resident W_obs / W_act
                  + 3 * H * 4                    # f32 biases + w_score row
                  + 2 * tb * 4)                  # output tiles, double-buffered
    cp_kwargs = dict(dimension_semantics=("parallel",))
    if 2 * vmem_bytes > 16 * 1024 * 1024:
        cp_kwargs["vmem_limit_bytes"] = min(4 * vmem_bytes, 64 * 1024 * 1024)
    compiler_params = pltpu.CompilerParams(**cp_kwargs)

    out = pl.pallas_call(
        qnet_kernel,
        out_shape=jax.ShapeDtypeStruct((grid, 1, tb), jnp.float32),
        grid=(grid,),
        in_specs=[
            pl.BlockSpec((tb, E), lambda i: (i, 0)),             # obs   (pipelined)
            pl.BlockSpec((tb, E), lambda i: (i, 0)),             # act   (pipelined)
            pl.BlockSpec((E, H), lambda i: (0, 0)),              # W_obs (VMEM-resident)
            pl.BlockSpec((E, H), lambda i: (0, 0)),              # W_act (VMEM-resident)
            pl.BlockSpec((1, H), lambda i: (0, 0)),              # b_obs (resident)
            pl.BlockSpec((1, H), lambda i: (0, 0)),              # b_act (resident)
            pl.BlockSpec((1, H), lambda i: (0, 0)),              # w_score row
            pl.BlockSpec(memory_space=pltpu.MemorySpace.SMEM),   # b_score scalar
        ],
        out_specs=pl.BlockSpec((1, 1, tb), lambda i: (i, 0, 0)),
        compiler_params=compiler_params,
    )(observation, actions, fused["w_obs"], fused["w_act"],
      fused["b_obs"], fused["b_act"], fused["w_score"], fused["b_score"])

    # Drop the garbage tail of the partial last tile; rows are independent.
    return out.reshape(grid * tb, 1)[:B]


def init_params(key, embedding_size, hidden_size):
    """PyTorch-style init (U(+/- 1/sqrt(fan_in))).  w_obs/w_act stored
    pre-transposed as [in, out]; w_score in PyTorch layout (1, H)."""
    ks = jax.random.split(key, 6)
    E, H = embedding_size, hidden_size

    def uniform(k, shape, fan_in):
        bound = 1.0 / (fan_in ** 0.5)
        return jax.random.uniform(k, shape, jnp.float32, -bound, bound)

    return {
        "w_obs": uniform(ks[0], (E, H), E),
        "b_obs": uniform(ks[1], (1, H), E),
        "w_act": uniform(ks[2], (E, H), E),
        "b_act": uniform(ks[3], (1, H), E),
        "w_score": uniform(ks[4], (1, H), H),
        "b_score": uniform(ks[5], (1,), H),
    }


def qnet_reference(observation, actions, params, compute_dtype=jnp.float32):
    """Pure-JAX reference matching the kernel's dtype policy (f32 accum)."""
    cd = compute_dtype
    obs_h = jnp.dot(observation.astype(cd), params["w_obs"].astype(cd),
                    preferred_element_type=jnp.float32) + params["b_obs"]
    act_h = jnp.dot(actions.astype(cd), params["w_act"].astype(cd),
                    preferred_element_type=jnp.float32) + params["b_act"]
    z = obs_h * act_h
    z = jnp.where(z >= 0, z, 0.2 * z)
    return (jnp.dot(z, params["w_score"].T, preferred_element_type=jnp.float32)
            + params["b_score"])


if __name__ == "__main__":
    key = jax.random.PRNGKey(0)
    k_obs, k_act, k_params, k_big = jax.random.split(key, 4)

    batch, embedding_size, hidden_size = 8, 32, 32
    observation = jax.random.normal(k_obs, (batch, embedding_size), jnp.float32)
    actions = jax.random.normal(k_act, (batch, embedding_size), jnp.float32)
    params = init_params(k_params, embedding_size, hidden_size)

    # Exact f32 path (weights kept in f32) vs the pure-JAX reference.
    fused_f32 = fuse_params(params, weight_dtype=jnp.float32)
    q = jax.block_until_ready(qnet_forward(observation, actions, fused_f32))
    q_ref = qnet_reference(observation, actions, params)
    assert q.shape == (batch, 1)
    assert jnp.allclose(q, q_ref, atol=1e-4, rtol=1e-4), "f32 mismatch vs reference"

    # Non-divisible batch exercises the cdiv grid + partial-last-block path.
    big_b = 1000
    kb1, kb2 = jax.random.split(k_big)
    obs_big = jax.random.normal(kb1, (big_b, embedding_size), jnp.float32)
    act_big = jax.random.normal(kb2, (big_b, embedding_size), jnp.float32)
    q_big = jax.block_until_ready(
        qnet_forward(obs_big, act_big, fused_f32, block_rows=256))
    q_big_ref = qnet_reference(obs_big, act_big, params)
    assert q_big.shape == (big_b, 1)
    assert jnp.allclose(q_big, q_big_ref, atol=1e-4, rtol=1e-4), "grid mismatch"

    # Default bf16 streaming path (f32 accumulation) vs bf16-emulated reference.
    fused_bf16 = fuse_params(params)   # bf16 weights / bf16 activation stream
    q_bf16 = jax.block_until_ready(qnet_forward(obs_big, act_big, fused_bf16))
    q_bf16_ref = qnet_reference(obs_big, act_big, params,
                                compute_dtype=jnp.bfloat16)
    assert jnp.allclose(q_bf16, q_bf16_ref, atol=2e-3, rtol=2e-3), "bf16 mismatch"

    print("KERNEL_OK")
</pallas_src>

<mosaic_0001>
module attributes {stable_mosaic.version = 11 : i64} {
  func.func @qnet_kernel(%arg0: i32, %arg1: memref<8x32xf32, #tpu.memory_space<vmem>>, %arg2: memref<8x32xf32, #tpu.memory_space<vmem>>, %arg3: memref<32x32xf32, #tpu.memory_space<vmem>>, %arg4: memref<32x32xf32, #tpu.memory_space<vmem>>, %arg5: memref<1x32xf32, #tpu.memory_space<vmem>>, %arg6: memref<1x32xf32, #tpu.memory_space<vmem>>, %arg7: memref<1x32xf32, #tpu.memory_space<vmem>>, %arg8: memref<1xf32, #tpu.memory_space<smem>>, %arg9: memref<1x1x8xf32, #tpu.memory_space<vmem>>) attributes {dimension_semantics = [#tpu.dimension_semantics<parallel>], iteration_bounds = array<i64: 1>, scalar_prefetch = 0 : i64, scratch_operands = 0 : i64, tpu.core_type = #tpu.core_type<tc>, window_params = [{transform_indices = @transform_0, window_bounds = array<i64: 8, 32>}, {transform_indices = @transform_1, window_bounds = array<i64: 8, 32>}, {pipeline_mode = #tpu.pipeline_mode<synchronous>, transform_indices = @transform_2, window_bounds = array<i64: 32, 32>}, {pipeline_mode = #tpu.pipeline_mode<synchronous>, transform_indices = @transform_3, window_bounds = array<i64: 32, 32>}, {pipeline_mode = #tpu.pipeline_mode<synchronous>, transform_indices = @transform_4, window_bounds = array<i64: 1, 32>}, {pipeline_mode = #tpu.pipeline_mode<synchronous>, transform_indices = @transform_5, window_bounds = array<i64: 1, 32>}, {pipeline_mode = #tpu.pipeline_mode<synchronous>, transform_indices = @transform_6, window_bounds = array<i64: 1, 32>}, {transform_indices = @transform_7, window_bounds = array<i64: 1>}, {transform_indices = @transform_8, window_bounds = array<i64: 1, 1, 8>}]} {
    %c0 = arith.constant 0 : index
    %c0_0 = arith.constant 0 : index
    %0 = vector.load %arg1[%c0, %c0_0] : memref<8x32xf32, #tpu.memory_space<vmem>>, vector<8x32xf32>
    %c0_1 = arith.constant 0 : index
    %c0_2 = arith.constant 0 : index
    %1 = vector.load %arg3[%c0_1, %c0_2] : memref<32x32xf32, #tpu.memory_space<vmem>>, vector<32x32xf32>
    %cst = arith.constant dense<0.000000e+00> : vector<8x32xf32>
    %2 = tpu.matmul %0, %1, %cst {dimension_numbers = #tpu.dot_dimension_numbers<[1], [0], [0], [1], [0, 0, 1, 1], [], []>} : vector<8x32xf32>, vector<32x32xf32>, vector<8x32xf32> -> vector<8x32xf32>
    %c0_3 = arith.constant 0 : index
    %c0_4 = arith.constant 0 : index
    %3 = vector.load %arg5[%c0_3, %c0_4] : memref<1x32xf32, #tpu.memory_space<vmem>>, vector<1x32xf32>
    %4 = vector.broadcast %3 : vector<1x32xf32> to vector<8x32xf32>
    %5 = arith.addf %2, %4 : vector<8x32xf32>
    %c0_5 = arith.constant 0 : index
    %c0_6 = arith.constant 0 : index
    %6 = vector.load %arg2[%c0_5, %c0_6] : memref<8x32xf32, #tpu.memory_space<vmem>>, vector<8x32xf32>
    %c0_7 = arith.constant 0 : index
    %c0_8 = arith.constant 0 : index
    %7 = vector.load %arg4[%c0_7, %c0_8] : memref<32x32xf32, #tpu.memory_space<vmem>>, vector<32x32xf32>
    %cst_9 = arith.constant dense<0.000000e+00> : vector<8x32xf32>
    %8 = tpu.matmul %6, %7, %cst_9 {dimension_numbers = #tpu.dot_dimension_numbers<[1], [0], [0], [1], [0, 0, 1, 1], [], []>} : vector<8x32xf32>, vector<32x32xf32>, vector<8x32xf32> -> vector<8x32xf32>
    %c0_10 = arith.constant 0 : index
    %c0_11 = arith.constant 0 : index
    %9 = vector.load %arg6[%c0_10, %c0_11] : memref<1x32xf32, #tpu.memory_space<vmem>>, vector<1x32xf32>
    %10 = vector.broadcast %9 : vector<1x32xf32> to vector<8x32xf32>
    %11 = arith.addf %8, %10 : vector<8x32xf32>
    %12 = arith.mulf %5, %11 : vector<8x32xf32>
    %cst_12 = arith.constant 0.000000e+00 : f32
    %13 = vector.broadcast %cst_12 : f32 to vector<8x32xf32>
    %14 = arith.cmpf oge, %12, %13 : vector<8x32xf32>
    %cst_13 = arith.constant 2.000000e-01 : f32
    %15 = vector.broadcast %cst_13 : f32 to vector<8x32xf32>
    %16 = arith.mulf %15, %12 : vector<8x32xf32>
    %17 = arith.select %14, %12, %16 : vector<8x32xi1>, vector<8x32xf32>
    %c0_14 = arith.constant 0 : index
    %c0_15 = arith.constant 0 : index
    %18 = vector.load %arg7[%c0_14, %c0_15] : memref<1x32xf32, #tpu.memory_space<vmem>>, vector<1x32xf32>
    %19 = vector.broadcast %18 : vector<1x32xf32> to vector<8x32xf32>
    %20 = arith.mulf %17, %19 : vector<8x32xf32>
    %cst_16 = arith.constant dense<0.000000e+00> : vector<8xf32>
    %21 = vector.multi_reduction <add>, %20, %cst_16 [1] : vector<8x32xf32> to vector<8xf32>
    %c0_17 = arith.constant 0 : index
    %22 = memref.load %arg8[%c0_17] : memref<1xf32, #tpu.memory_space<smem>>
    %23 = vector.broadcast %22 : f32 to vector<8xf32>
    %24 = arith.addf %21, %23 : vector<8xf32>
    %25 = vector.shape_cast %24 : vector<8xf32> to vector<1x1x8xf32>
    %c0_18 = arith.constant 0 : index
    %c0_19 = arith.constant 0 : index
    %c0_20 = arith.constant 0 : index
    %26 = vector.load %arg9[%c0_18, %c0_19, %c0_20] : memref<1x1x8xf32, #tpu.memory_space<vmem>>, vector<1x1x8xf32>
    tpu.vector_store %arg9[%c0_18, %c0_19, %c0_20], %25 {strides = array<i32>} : memref<1x1x8xf32, #tpu.memory_space<vmem>>, vector<1x1x8xf32>,
    return
  }
  func.func @transform_0(%arg0: i32) -> (i32, i32) {
    %c0_i32 = arith.constant 0 : i32
    %c0_i32_0 = arith.constant 0 : i32
    return %arg0, %c0_i32 : i32, i32
  }
  func.func @transform_1(%arg0: i32) -> (i32, i32) {
    %c0_i32 = arith.constant 0 : i32
    %c0_i32_0 = arith.constant 0 : i32
    return %arg0, %c0_i32 : i32, i32
  }
  func.func @transform_2(%arg0: i32) -> (i32, i32) {
    %c0_i32 = arith.constant 0 : i32
    %c0_i32_0 = arith.constant 0 : i32
    %c0_i32_1 = arith.constant 0 : i32
    return %c0_i32, %c0_i32_0 : i32, i32
  }
  func.func @transform_3(%arg0: i32) -> (i32, i32) {
    %c0_i32 = arith.constant 0 : i32
    %c0_i32_0 = arith.constant 0 : i32
    %c0_i32_1 = arith.constant 0 : i32
    return %c0_i32, %c0_i32_0 : i32, i32
  }
  func.func @transform_4(%arg0: i32) -> (i32, i32) {
    %c0_i32 = arith.constant 0 : i32
    %c0_i32_0 = arith.constant 0 : i32
    %c0_i32_1 = arith.constant 0 : i32
    return %c0_i32, %c0_i32_0 : i32, i32
  }
  func.func @transform_5(%arg0: i32) -> (i32, i32) {
    %c0_i32 = arith.constant 0 : i32
    %c0_i32_0 = arith.constant 0 : i32
    %c0_i32_1 = arith.constant 0 : i32
    return %c0_i32, %c0_i32_0 : i32, i32
  }
  func.func @transform_6(%arg0: i32) -> (i32, i32) {
    %c0_i32 = arith.constant 0 : i32
    %c0_i32_0 = arith.constant 0 : i32
    %c0_i32_1 = arith.constant 0 : i32
    return %c0_i32, %c0_i32_0 : i32, i32
  }
  func.func @transform_7(%arg0: i32) -> i32 {
    %c0_i32 = arith.constant 0 : i32
    %c0_i32_0 = arith.constant 0 : i32
    return %c0_i32 : i32
  }
  func.func @transform_8(%arg0: i32) -> (i32, i32, i32) {
    %c0_i32 = arith.constant 0 : i32
    %c0_i32_0 = arith.constant 0 : i32
    %c0_i32_1 = arith.constant 0 : i32
    return %arg0, %c0_i32, %c0_i32_0 : i32, i32, i32
  }
}

</mosaic_0001>

<llo_original>
// kernel: tpu_custom_call.1
$region0: #{tpu_custom_call.1}
  #allocation0 [shape = 'u32[]', space=smem, size = 0x4, offset = 0x4, fixed_abs, tag = 'smem constant byte address 0x4 - core index']
  #allocation1 [shape = 'u32[144,128]{1,0:T(1,128)}', space=vmem, size = 0x12000, scoped, tag = 'internal scratch']
  #allocation2 [shape = 'f32[1]{0:T(128)S(6)}', space=smem, size = 0x200, scoped, tag = 'scoped memory for tpu_custom_call.1']
  %s0 = inlined_call_operand.hbm [shape: f32[8,32], index: 0, kind: input, shape index: {}]
  %s1 = inlined_call_operand.hbm [shape: f32[8,32], index: 1, kind: input, shape index: {}]
  %s2 = inlined_call_operand.hbm [shape: f32[32,32], index: 2, kind: input, shape index: {}]
  %s3 = inlined_call_operand.hbm [shape: f32[32,32], index: 3, kind: input, shape index: {}]
  %s4 = inlined_call_operand.vmem [shape: f32[1,32], index: 4, kind: input, shape index: {}]
  %s5 = inlined_call_operand.vmem [shape: f32[1,32], index: 5, kind: input, shape index: {}]
  %s6 = inlined_call_operand.vmem [shape: f32[1,32], index: 6, kind: input, shape index: {}]
  %s7 = inlined_call_operand.<no memory space> [shape: f32[1], index: 7, kind: input, shape index: {}]
  %s8 = inlined_call_operand.hbm [shape: f32[1,1,8], index: 8, kind: output, shape index: {}]
  %s9 = sld [smem:[#allocation0]]
  $region58: #{tpu_custom_call.1} parent=0
    _
  %s11 = ssub.s32 1, %s9
  %s12 = scalar_select 0, %s11, %s9
  %13 = sst [smem:[#allocation2]] %s7
  $region1: #{tpu_custom_call.1} parent=0
    #allocation3 [shape = 'u8[4096]{0}', space=vmem, size = 0x1000, scoped, tag = 'input window, operand 0, single buffered']
    #allocation4 [shape = 's32[1]{0}', space=sflag, size = 0x4, scoped, tag = 'scoped memory for tpu_custom_call.1']
    #allocation5 [shape = 's32[1]{0}', space=sflag, size = 0x4, scoped, tag = 'scoped memory for tpu_custom_call.1']
    #allocation6 [shape = 'u8[4096]{0}', space=vmem, size = 0x1000, scoped, tag = 'input window, operand 1, single buffered']
    #allocation7 [shape = 's32[1]{0}', space=sflag, size = 0x4, scoped, tag = 'scoped memory for tpu_custom_call.1']
    #allocation8 [shape = 'u8[16384]{0}', space=vmem, size = 0x4000, scoped, tag = 'input window, operand 2, single buffered']
    #allocation9 [shape = 'u8[16384]{0}', space=vmem, size = 0x4000, scoped, tag = 'input window, operand 3, single buffered']
    #allocation10 [shape = 's32[1]{0}', space=sflag, size = 0x4, scoped, tag = 'scoped memory for tpu_custom_call.1']
    #allocation11 [shape = 'u8[512]{0}', space=vmem, size = 0x400, scoped, tag = 'output window, operand 0, single buffered']
    %14 = vsyncpa [#allocation4], 0
    %15 = vsyncpa [#allocation7], 0
    %16 = vsyncpa [#allocation10], 0
    %17 = vsyncpa [#allocation5], 0
    // Predicated region
    $region2: #{tpu_custom_call.1} parent=1 // pred_check
      _
    $region3: #{tpu_custom_call.1} parent=1 // pred_check_branch
      %19 = sbr.rel (0) target = $region5
    $region4: #{tpu_custom_call.1} parent=1 // pred_region
      %s21 = ssub.s32 128, 128
      %22 = vsyncadd [#allocation4], %s21
      %s24 = sshll.u32 [#allocation3], 4
      %s25 = int_to_ptr.vmem [resolvable:$true] %s24
      %27 = dma.hbm_to_vmem [thread:$0]  %s0, 128, %s25, [#allocation4]
    $region5: #{tpu_custom_call.1} parent=1 // pred_fallthru
      _
    // Predicated region
    $region6: #{tpu_custom_call.1} parent=1 // pred_check
      _
    $region7: #{tpu_custom_call.1} parent=1 // pred_check_branch
      %29 = sbr.rel (0) target = $region9
    $region8: #{tpu_custom_call.1} parent=1 // pred_region
      %s31 = ssub.s32 128, 128
      %32 = vsyncadd [#allocation7], %s31
      %s34 = sshll.u32 [#allocation6], 4
      %s35 = int_to_ptr.vmem [resolvable:$true] %s34
      %37 = dma.hbm_to_vmem [thread:$0]  %s1, 128, %s35, [#allocation7]
    $region9: #{tpu_custom_call.1} parent=1 // pred_fallthru
      _
    // Predicated region
    $region10: #{tpu_custom_call.1} parent=1 // pred_check
      _
    $region11: #{tpu_custom_call.1} parent=1 // pred_check_branch
      %39 = sbr.rel (0) target = $region13
    $region12: #{tpu_custom_call.1} parent=1 // pred_region
      %s41 = ssub.s32 512, 512
      %42 = vsyncadd [#allocation7], %s41
      %s43 = sshll.u32 [#allocation8], 4
      %s44 = int_to_ptr.vmem [resolvable:$true] %s43
      %49 = dma.hbm_to_vmem [thread:$0]  %s2, 512, %s44, [#allocation7], 128, 128, 8
    $region13: #{tpu_custom_call.1} parent=1 // pred_fallthru
      _
    // Predicated region
    $region14: #{tpu_custom_call.1} parent=1 // pred_check
      _
    $region15: #{tpu_custom_call.1} parent=1 // pred_check_branch
      %51 = sbr.rel (0) target = $region17
    $region16: #{tpu_custom_call.1} parent=1 // pred_region
      %s53 = ssub.s32 512, 512
      %54 = vsyncadd [#allocation10], %s53
      %s55 = sshll.u32 [#allocation9], 4
      %s56 = int_to_ptr.vmem [resolvable:$true] %s55
      %61 = dma.hbm_to_vmem [thread:$0]  %s3, 512, %s56, [#allocation10], 128, 128, 8
    $region17: #{tpu_custom_call.1} parent=1 // pred_fallthru
      _
    // Predicated region
    $region18: #{tpu_custom_call.1} parent=1 // pred_check
      _
    $region19: #{tpu_custom_call.1} parent=1 // pred_check_branch
      %63 = sbr.rel (0) target = $region21
    $region20: #{tpu_custom_call.1} parent=1 // pred_region
      _
    $region21: #{tpu_custom_call.1} parent=1 // pred_fallthru
      _
    // Predicated region
    $region22: #{tpu_custom_call.1} parent=1 // pred_check
      _
    $region23: #{tpu_custom_call.1} parent=1 // pred_check_branch
      %65 = sbr.rel (0) target = $region25
    $region24: #{tpu_custom_call.1} parent=1 // pred_region
      _
    $region25: #{tpu_custom_call.1} parent=1 // pred_fallthru
      _
    // Predicated region
    $region26: #{tpu_custom_call.1} parent=1 // pred_check
      _
    $region27: #{tpu_custom_call.1} parent=1 // pred_check_branch
      %67 = sbr.rel (0) target = $region29
    $region28: #{tpu_custom_call.1} parent=1 // pred_region
      _
    $region29: #{tpu_custom_call.1} parent=1 // pred_fallthru
      _
    // Predicated region
    $region30: #{tpu_custom_call.1} parent=1 // pred_check
      _
    $region31: #{tpu_custom_call.1} parent=1 // pred_check_branch
      %69 = sbr.rel (0) target = $region33
    $region32: #{tpu_custom_call.1} parent=1 // pred_region
      _
    $region33: #{tpu_custom_call.1} parent=1 // pred_fallthru
      _
    // Predicated region
    $region34: #{tpu_custom_call.1} parent=1 // pred_check
      _
    $region35: #{tpu_custom_call.1} parent=1 // pred_check_branch
      %71 = sbr.rel (0) target = $region37
    $region36: #{tpu_custom_call.1} parent=1 // pred_region
      %72 = dma.done [#allocation4], 128
    $region37: #{tpu_custom_call.1} parent=1 // pred_fallthru
      _
    // Predicated region
    $region38: #{tpu_custom_call.1} parent=1 // pred_check
      _
    $region39: #{tpu_custom_call.1} parent=1 // pred_check_branch
      %74 = sbr.rel (0) target = $region41
    $region40: #{tpu_custom_call.1} parent=1 // pred_region
      %75 = dma.done [#allocation7], 128
    $region41: #{tpu_custom_call.1} parent=1 // pred_fallthru
      _
    // Predicated region
    $region42: #{tpu_custom_call.1} parent=1 // pred_check
      _
    $region43: #{tpu_custom_call.1} parent=1 // pred_check_branch
      %77 = sbr.rel (0) target = $region45
    $region44: #{tpu_custom_call.1} parent=1 // pred_region
      %78 = dma.done [#allocation7], 512
    $region45: #{tpu_custom_call.1} parent=1 // pred_fallthru
      _
    // Predicated region
    $region46: #{tpu_custom_call.1} parent=1 // pred_check
      _
    $region47: #{tpu_custom_call.1} parent=1 // pred_check_branch
      %80 = sbr.rel (0) target = $region49
    $region48: #{tpu_custom_call.1} parent=1 // pred_region
      %81 = dma.done [#allocation10], 512
    $region49: #{tpu_custom_call.1} parent=1 // pred_fallthru
      _
    %v82 = vld [vmem:[#allocation3] sm:$0xff]
    %v83 = vld [vmem:[#allocation8] sm:$0xff]
    %v84 = vld [vmem:[#allocation8 + $0x8] sm:$0xff]
    %v85 = vld [vmem:[#allocation8 + $0x10] sm:$0xff]
    %v86 = vld [vmem:[#allocation8 + $0x18] sm:$0xff]
    %v87 = vld [vmem:[%s4] sm:$0x1]
    %v89 = vlaneseq
    %v90 = vshrl.u32 %v89, 7
    %v91 = vsub.s32 0, %v90
    %v92 = vrot.slane %v87, %v91
    %vm94 = vcmask 261120
    %v96 = vsel %vm94, %v82, 0
    %98 = vmatprep.subr.mxu0 0.0
    %99 = vmatpush1.msra.mxu0 0.0
    %100 = vmatprep.subr.mxu0 0.0
    %101 = vmatpush1.msra.mxu0 0.0
    %102 = vmatprep.subr.mxu0 0.0
    %103 = vmatpush1.msra.mxu0 0.0
    %104 = vmatprep.subr.mxu0 0.0
    %105 = vmatpush1.msra.mxu0 0.0
    %106 = vmatprep.subr.mxu0 0.0
    %107 = vmatpush1.msra.mxu0 0.0
    %108 = vmatprep.subr.mxu0 0.0
    %109 = vmatpush1.msra.mxu0 0.0
    %110 = vmatprep.subr.mxu0 0.0
    %111 = vmatpush1.msra.mxu0 0.0
    %112 = vmatprep.subr.mxu0 0.0
    %113 = vmatpush1.msra.mxu0 0.0
    %114 = vmatprep.subr.mxu0 0.0
    %115 = vmatpush1.msra.mxu0 0.0
    %116 = vmatprep.subr.mxu0 0.0
    %117 = vmatpush1.msra.mxu0 0.0
    %118 = vmatprep.subr.mxu0 0.0
    %119 = vmatpush1.msra.mxu0 0.0
    %120 = vmatprep.subr.mxu0 0.0
    %121 = vmatpush1.msra.mxu0 0.0
    %122 = vmatprep.subr.mxu0 0.0
    %123 = vmatpush1.msra.mxu0 %v86
    %124 = vmatprep.subr.mxu0 0.0
    %125 = vmatpush1.msra.mxu0 %v85
    %126 = vmatprep.subr.mxu0 0.0
    %127 = vmatpush1.msra.mxu0 %v84
    %128 = vmatprep.subr.mxu0 0.0
    %129 = vmatpush1.msra.mxu0 %v83
    %130 = vmatprep.subr.mxu0 0.0
    %131 = vmatpush2.msra.mxu0 0.0
    %132 = vmatprep.subr.mxu0 0.0
    %133 = vmatpush2.msra.mxu0 0.0
    %134 = vmatprep.subr.mxu0 0.0
    %135 = vmatpush2.msra.mxu0 0.0
    %136 = vmatprep.subr.mxu0 0.0
    %137 = vmatpush2.msra.mxu0 0.0
    %138 = vmatprep.subr.mxu0 0.0
    %139 = vmatpush2.msra.mxu0 0.0
    %140 = vmatprep.subr.mxu0 0.0
    %141 = vmatpush2.msra.mxu0 0.0
    %142 = vmatprep.subr.mxu0 0.0
    %143 = vmatpush2.msra.mxu0 0.0
    %144 = vmatprep.subr.mxu0 0.0
    %145 = vmatpush2.msra.mxu0 0.0
    %146 = vmatprep.subr.mxu0 0.0
    %147 = vmatpush2.msra.mxu0 0.0
    %148 = vmatprep.subr.mxu0 0.0
    %149 = vmatpush2.msra.mxu0 0.0
    %150 = vmatprep.subr.mxu0 0.0
    %151 = vmatpush2.msra.mxu0 0.0
    %152 = vmatprep.subr.mxu0 0.0
    %153 = vmatpush2.msra.mxu0 0.0
    %154 = vmatprep.subr.mxu0 0.0
    %155 = vmatpush2.msra.mxu0 0.0
    %156 = vmatprep.subr.mxu0 0.0
    %157 = vmatpush2.msra.mxu0 0.0
    %158 = vmatprep.subr.mxu0 0.0
    %159 = vmatpush2.msra.mxu0 0.0
    %160 = vmatprep.subr.mxu0 0.0
    %161 = vmatpush2.msra.mxu0 0.0
    %162 = vmatprep.mubr.f32.mxu0 0.0
    %163 = vmatmul.mubr.f32.gmra.mxu0 %v96
    %v164 = vpop.f32.mrf.mxu0
    %v165 = vadd.f32 %v92, %v164
    %v166 = vpop.f32.mrf.mxu0
    %167 = vdwg.mxu0
    %v168 = vld [vmem:[#allocation6] sm:$0xff]
    %v169 = vld [vmem:[#allocation9] sm:$0xff]
    %v170 = vld [vmem:[#allocation9 + $0x8] sm:$0xff]
    %v171 = vld [vmem:[#allocation9 + $0x10] sm:$0xff]
    %v172 = vld [vmem:[#allocation9 + $0x18] sm:$0xff]
    %v173 = vld [vmem:[%s5] sm:$0x1]
    %v175 = vlaneseq
    %v176 = vshrl.u32 %v175, 7
    %v177 = vsub.s32 0, %v176
    %v178 = vrot.slane %v173, %v177
    %v181 = vsel %vm94, %v168, 0
    %183 = vmatprep.subr.mxu0 0.0
    %184 = vmatpush1.msra.mxu0 0.0
    %185 = vmatprep.subr.mxu0 0.0
    %186 = vmatpush1.msra.mxu0 0.0
    %187 = vmatprep.subr.mxu0 0.0
    %188 = vmatpush1.msra.mxu0 0.0
    %189 = vmatprep.subr.mxu0 0.0
    %190 = vmatpush1.msra.mxu0 0.0
    %191 = vmatprep.subr.mxu0 0.0
    %192 = vmatpush1.msra.mxu0 0.0
    %193 = vmatprep.subr.mxu0 0.0
    %194 = vmatpush1.msra.mxu0 0.0
    %195 = vmatprep.subr.mxu0 0.0
    %196 = vmatpush1.msra.mxu0 0.0
    %197 = vmatprep.subr.mxu0 0.0
    %198 = vmatpush1.msra.mxu0 0.0
    %199 = vmatprep.subr.mxu0 0.0
    %200 = vmatpush1.msra.mxu0 0.0
    %201 = vmatprep.subr.mxu0 0.0
    %202 = vmatpush1.msra.mxu0 0.0
    %203 = vmatprep.subr.mxu0 0.0
    %204 = vmatpush1.msra.mxu0 0.0
    %205 = vmatprep.subr.mxu0 0.0
    %206 = vmatpush1.msra.mxu0 0.0
    %207 = vmatprep.subr.mxu0 0.0
    %208 = vmatpush1.msra.mxu0 %v172
    %209 = vmatprep.subr.mxu0 0.0
    %210 = vmatpush1.msra.mxu0 %v171
    %211 = vmatprep.subr.mxu0 0.0
    %212 = vmatpush1.msra.mxu0 %v170
    %213 = vmatprep.subr.mxu0 0.0
    %214 = vmatpush1.msra.mxu0 %v169
    %215 = vmatprep.subr.mxu0 0.0
    %216 = vmatpush2.msra.mxu0 0.0
    %217 = vmatprep.subr.mxu0 0.0
    %218 = vmatpush2.msra.mxu0 0.0
    %219 = vmatprep.subr.mxu0 0.0
    %220 = vmatpush2.msra.mxu0 0.0
    %221 = vmatprep.subr.mxu0 0.0
    %222 = vmatpush2.msra.mxu0 0.0
    %223 = vmatprep.subr.mxu0 0.0
    %224 = vmatpush2.msra.mxu0 0.0
    %225 = vmatprep.subr.mxu0 0.0
    %226 = vmatpush2.msra.mxu0 0.0
    %227 = vmatprep.subr.mxu0 0.0
    %228 = vmatpush2.msra.mxu0 0.0
    %229 = vmatprep.subr.mxu0 0.0
    %230 = vmatpush2.msra.mxu0 0.0
    %231 = vmatprep.subr.mxu0 0.0
    %232 = vmatpush2.msra.mxu0 0.0
    %233 = vmatprep.subr.mxu0 0.0
    %234 = vmatpush2.msra.mxu0 0.0
    %235 = vmatprep.subr.mxu0 0.0
    %236 = vmatpush2.msra.mxu0 0.0
    %237 = vmatprep.subr.mxu0 0.0
    %238 = vmatpush2.msra.mxu0 0.0
    %239 = vmatprep.subr.mxu0 0.0
    %240 = vmatpush2.msra.mxu0 0.0
    %241 = vmatprep.subr.mxu0 0.0
    %242 = vmatpush2.msra.mxu0 0.0
    %243 = vmatprep.subr.mxu0 0.0
    %244 = vmatpush2.msra.mxu0 0.0
    %245 = vmatprep.subr.mxu0 0.0
    %246 = vmatpush2.msra.mxu0 0.0
    %247 = vmatprep.mubr.f32.mxu0 0.0
    %248 = vmatmul.mubr.f32.gmra.mxu0 %v181
    %v249 = vpop.f32.mrf.mxu0
    %v250 = vadd.f32 %v178, %v249
    %v251 = vpop.f32.mrf.mxu0
    %252 = vdwg.mxu0
    %v253 = vmul.f32 %v165, %v250
    %vm254 = vcmp.ge.f32.partialorder %v253, 0.0
    %v255 = vmul.f32 %v253, 0.2
    %v256 = vsel %vm254, %v253, %v255
    %v257 = vld [vmem:[%s6] sm:$0x1]
    %v259 = vlaneseq
    %v260 = vshrl.u32 %v259, 7
    %v261 = vsub.s32 0, %v260
    %v262 = vrot.slane %v257, %v261
    %v264 = vmul.f32 %v256, %v262
    %v265 = vsel %vm94, %v264, 0.0
    %266 = vadd.xlane.f32.xlu0 %v265
    %v267 = vpop.xlane.xlu0 %266
    %s268 = sld [smem:[#allocation2]]
    %v269 = vstv %s268
    %v270 = vadd.f32 %v267, %v269
    %v272 = vlaneseq
    %v273 = vand.u32 %v272, 127
    %v274 = vlaneseq
    %v275 = vshrl.u32 %v274, 7
    %v276 = vsub.s32 %v273, %v275
    %v277 = vrot.slane %v270, %v276
    %vm279 = vcmask 57344
    %280 = vst.msk [vmem:[#allocation11] sm:$0x1] %vm279, %v277
    // Predicated region
    $region50: #{tpu_custom_call.1} parent=1 // pred_check
      _
    $region51: #{tpu_custom_call.1} parent=1 // pred_check_branch
      %282 = sbr.rel (0) target = $region53
    $region52: #{tpu_custom_call.1} parent=1 // pred_region
      %s284 = ssub.s32 16, 16
      %285 = vsyncadd [#allocation5], %s284
      %s287 = sshll.u32 [#allocation11], 4
      %s288 = int_to_ptr.vmem [resolvable:$true] %s287
      %290 = dma.vmem_to_hbm [thread:$0]  %s288, 16, %s8, [#allocation5]
    $region53: #{tpu_custom_call.1} parent=1 // pred_fallthru
      _
    // Predicated region
    $region54: #{tpu_custom_call.1} parent=1 // pred_check
      _
    $region55: #{tpu_custom_call.1} parent=1 // pred_check_branch
      %292 = sbr.rel (0) target = $region57
    $region56: #{tpu_custom_call.1} parent=1 // pred_region
      %293 = dma.done [#allocation5], 16
    $region57: #{tpu_custom_call.1} parent=1 // pred_fallthru
      _
    %294 = vsyncpa [#allocation4], 1
    %295 = vsyncpa [#allocation7], 1
    %296 = vsyncpa [#allocation10], 1
    %297 = vsyncpa [#allocation5], 1

</llo_original>
